<compile_context>
chip_gen: v5e
topology: v5e:2x2
jax: 0.10.0
libtpu: 0.0.40
codegen_flags: <defaults>
</compile_context>

<pallas_src>
import jax
import jax.numpy as jnp
from jax import lax
from jax.experimental import pallas as pl
from jax.experimental.pallas import tpu as pltpu


def _nsp_head_kernel(x_ref, w_ref, b_ref, o_ref):
    # x_ref: (TB, H), w_ref: (2, H), b_ref: (1, 2), o_ref: (TB, 2)
    acc = lax.dot_general(
        x_ref[...],
        w_ref[...],
        dimension_numbers=(((1,), (1,)), ((), ())),  # contract H with H
        preferred_element_type=jnp.float32,
    )
    o_ref[...] = (acc + b_ref[...].astype(jnp.float32)).astype(o_ref.dtype)


def _sublane_multiple(dtype):
    # f32 -> 8, bf16 -> 16, int8/fp8 -> 32 (sub-32-bit packing along sublanes).
    itemsize = jnp.dtype(dtype).itemsize
    return max(8, 32 // itemsize)


def bert_only_nsp_head(pooled_output, weight, bias, *, block_b=512):
    """pooled_output: [B, H]; weight: [2, H] (PyTorch nn.Linear layout); bias: [2]."""
    B, H = pooled_output.shape
    assert weight.shape == (2, H)
    assert bias.shape == (2,)

    sub = _sublane_multiple(pooled_output.dtype)

    # Batch tile size: sublane-aligned, capped at block_b, no bigger than needed.
    tb = min(block_b, ((B + sub - 1) // sub) * sub)
    tb = ((tb + sub - 1) // sub) * sub

    # Pad B so the grid divides evenly; padded rows are zeros and are sliced off.
    b_pad = ((B + tb - 1) // tb) * tb
    x = pooled_output
    if b_pad != B:
        x = jnp.pad(x, ((0, b_pad - B), (0, 0)))

    b2d = bias.reshape(1, 2)

    out = pl.pallas_call(
        _nsp_head_kernel,
        out_shape=jax.ShapeDtypeStruct((b_pad, 2), pooled_output.dtype),
        grid_spec=pltpu.PrefetchScalarGridSpec(
            num_scalar_prefetch=0,
            grid=(b_pad // tb,),
            in_specs=[
                pl.BlockSpec((tb, H), lambda i: (i, 0)),  # streamed x tiles
                pl.BlockSpec((2, H), lambda i: (0, 0)),   # resident weight
                pl.BlockSpec((1, 2), lambda i: (0, 0)),   # resident bias
            ],
            out_specs=pl.BlockSpec((tb, 2), lambda i: (i, 0)),
        ),
        compiler_params=pltpu.CompilerParams(
            dimension_semantics=("parallel",),  # lets v7x shard tiles over 2 TCs
        ),
    )(x, weight, b2d)

    return out[:B]


if __name__ == "__main__":
    B, H = 2, 32  # small shapes consistent with the module (hidden_size=32)

    key = jax.random.PRNGKey(0)
    k_x, k_w, k_b = jax.random.split(key, 3)

    pooled_output = jax.random.normal(k_x, (B, H), dtype=jnp.float32)
    # nn.Linear(hidden_size, 2) parameter shapes.
    weight = jax.random.normal(k_w, (2, H), dtype=jnp.float32) * 0.02
    bias = jax.random.normal(k_b, (2,), dtype=jnp.float32) * 0.02

    out = bert_only_nsp_head(pooled_output, weight, bias)
    jax.block_until_ready(out)

    # Reference check in plain JAX.
    ref = pooled_output @ weight.T + bias
    assert out.shape == (B, 2)
    assert jnp.allclose(out, ref, atol=1e-5, rtol=1e-5)

    print("KERNEL_OK")
</pallas_src>

<mosaic_0001>
module attributes {stable_mosaic.version = 11 : i64} {
  func.func @_nsp_head_kernel(%arg0: i32, %arg1: memref<8x32xf32, #tpu.memory_space<vmem>>, %arg2: memref<2x32xf32, #tpu.memory_space<vmem>>, %arg3: memref<1x2xf32, #tpu.memory_space<vmem>>, %arg4: memref<8x2xf32, #tpu.memory_space<vmem>>) attributes {dimension_semantics = [#tpu.dimension_semantics<parallel>], iteration_bounds = array<i64: 1>, scalar_prefetch = 0 : i64, scratch_operands = 0 : i64, tpu.core_type = #tpu.core_type<tc>, window_params = [{transform_indices = @transform_0, window_bounds = array<i64: 8, 32>}, {pipeline_mode = #tpu.pipeline_mode<synchronous>, transform_indices = @transform_1, window_bounds = array<i64: 2, 32>}, {pipeline_mode = #tpu.pipeline_mode<synchronous>, transform_indices = @transform_2, window_bounds = array<i64: 1, 2>}, {transform_indices = @transform_3, window_bounds = array<i64: 8, 2>}]} {
    %c0 = arith.constant 0 : index
    %c0_0 = arith.constant 0 : index
    %0 = vector.load %arg1[%c0, %c0_0] : memref<8x32xf32, #tpu.memory_space<vmem>>, vector<8x32xf32>
    %c0_1 = arith.constant 0 : index
    %c0_2 = arith.constant 0 : index
    %1 = vector.load %arg2[%c0_1, %c0_2] : memref<2x32xf32, #tpu.memory_space<vmem>>, vector<2x32xf32>
    %cst = arith.constant dense<0.000000e+00> : vector<8x2xf32>
    %2 = tpu.matmul %0, %1, %cst {dimension_numbers = #tpu.dot_dimension_numbers<[1], [1], [0], [0], [0, 0, 1, 0], [], []>} : vector<8x32xf32>, vector<2x32xf32>, vector<8x2xf32> -> vector<8x2xf32>
    %c0_3 = arith.constant 0 : index
    %c0_4 = arith.constant 0 : index
    %3 = vector.load %arg3[%c0_3, %c0_4] : memref<1x2xf32, #tpu.memory_space<vmem>>, vector<1x2xf32>
    %4 = vector.broadcast %3 : vector<1x2xf32> to vector<8x2xf32>
    %5 = arith.addf %2, %4 : vector<8x2xf32>
    %c0_5 = arith.constant 0 : index
    %c0_6 = arith.constant 0 : index
    %6 = vector.load %arg4[%c0_5, %c0_6] : memref<8x2xf32, #tpu.memory_space<vmem>>, vector<8x2xf32>
    tpu.vector_store %arg4[%c0_5, %c0_6], %5 {strides = array<i32>} : memref<8x2xf32, #tpu.memory_space<vmem>>, vector<8x2xf32>,
    return
  }
  func.func @transform_0(%arg0: i32) -> (i32, i32) {
    %c0_i32 = arith.constant 0 : i32
    %c0_i32_0 = arith.constant 0 : i32
    return %arg0, %c0_i32 : i32, i32
  }
  func.func @transform_1(%arg0: i32) -> (i32, i32) {
    %c0_i32 = arith.constant 0 : i32
    %c0_i32_0 = arith.constant 0 : i32
    %c0_i32_1 = arith.constant 0 : i32
    return %c0_i32, %c0_i32_0 : i32, i32
  }
  func.func @transform_2(%arg0: i32) -> (i32, i32) {
    %c0_i32 = arith.constant 0 : i32
    %c0_i32_0 = arith.constant 0 : i32
    %c0_i32_1 = arith.constant 0 : i32
    return %c0_i32, %c0_i32_0 : i32, i32
  }
  func.func @transform_3(%arg0: i32) -> (i32, i32) {
    %c0_i32 = arith.constant 0 : i32
    %c0_i32_0 = arith.constant 0 : i32
    return %arg0, %c0_i32 : i32, i32
  }
}

</mosaic_0001>

<llo_original>
// kernel: tpu_custom_call.1
$region0: #{tpu_custom_call.1}
  #allocation0 [shape = 'u32[]', space=smem, size = 0x4, offset = 0x4, fixed_abs, tag = 'smem constant byte address 0x4 - core index']
  #allocation1 [shape = 'u32[72,128]{1,0:T(1,128)}', space=vmem, size = 0x9000, scoped, tag = 'internal scratch']
  %s0 = inlined_call_operand.hbm [shape: f32[8,32], index: 0, kind: input, shape index: {}]
  %s1 = inlined_call_operand.hbm [shape: f32[2,32], index: 1, kind: input, shape index: {}]
  %s2 = inlined_call_operand.vmem [shape: f32[1,2], index: 2, kind: input, shape index: {}]
  %s3 = inlined_call_operand.vmem [shape: f32[8,2], index: 3, kind: output, shape index: {}]
  %s4 = sld [smem:[#allocation0]]
  $region30: #{tpu_custom_call.1} parent=0
    _
  %s6 = ssub.s32 1, %s4
  %s7 = scalar_select 0, %s6, %s4
  $region1: #{tpu_custom_call.1} parent=0
    #allocation2 [shape = 'u8[4096]{0}', space=vmem, size = 0x1000, scoped, tag = 'input window, operand 0, single buffered']
    #allocation3 [shape = 's32[1]{0}', space=sflag, size = 0x4, scoped, tag = 'scoped memory for tpu_custom_call.1']
    #allocation4 [shape = 'u8[1024]{0}', space=vmem, size = 0x400, scoped, tag = 'input window, operand 1, single buffered']
    #allocation5 [shape = 's32[1]{0}', space=sflag, size = 0x4, scoped, tag = 'scoped memory for tpu_custom_call.1']
    %8 = vsyncpa [#allocation3], 0
    %9 = vsyncpa [#allocation5], 0
    // Predicated region
    $region2: #{tpu_custom_call.1} parent=1 // pred_check
      _
    $region3: #{tpu_custom_call.1} parent=1 // pred_check_branch
      %11 = sbr.rel (0) target = $region5
    $region4: #{tpu_custom_call.1} parent=1 // pred_region
      %13 = vsyncadd [#allocation3], 0
      %s15 = sshll.u32 %s0, 4
      %s16 = int_to_ptr.hbm [resolvable:$true] %s15
      %s17 = sshll.u32 [#allocation2], 4
      %s18 = int_to_ptr.vmem [resolvable:$true] %s17
      %20 = dma.hbm_to_vmem [thread:$0]  %s16, 128, %s18, [#allocation3]
    $region5: #{tpu_custom_call.1} parent=1 // pred_fallthru
      _
    // Predicated region
    $region6: #{tpu_custom_call.1} parent=1 // pred_check
      _
    $region7: #{tpu_custom_call.1} parent=1 // pred_check_branch
      %22 = sbr.rel (0) target = $region9
    $region8: #{tpu_custom_call.1} parent=1 // pred_region
      %24 = vsyncadd [#allocation5], 0
      %s26 = sshll.u32 %s1, 4
      %s27 = int_to_ptr.hbm [resolvable:$true] %s26
      %s28 = sshll.u32 [#allocation4], 4
      %s29 = int_to_ptr.vmem [resolvable:$true] %s28
      %31 = dma.hbm_to_vmem [thread:$0]  %s27, 32, %s29, [#allocation5]
    $region9: #{tpu_custom_call.1} parent=1 // pred_fallthru
      _
    // Predicated region
    $region10: #{tpu_custom_call.1} parent=1 // pred_check
      _
    $region11: #{tpu_custom_call.1} parent=1 // pred_check_branch
      %33 = sbr.rel (0) target = $region13
    $region12: #{tpu_custom_call.1} parent=1 // pred_region
      _
    $region13: #{tpu_custom_call.1} parent=1 // pred_fallthru
      _
    // Predicated region
    $region14: #{tpu_custom_call.1} parent=1 // pred_check
      _
    $region15: #{tpu_custom_call.1} parent=1 // pred_check_branch
      %35 = sbr.rel (0) target = $region17
    $region16: #{tpu_custom_call.1} parent=1 // pred_region
      %37 = dma.done [#allocation3], 128
    $region17: #{tpu_custom_call.1} parent=1 // pred_fallthru
      _
    // Predicated region
    $region18: #{tpu_custom_call.1} parent=1 // pred_check
      _
    $region19: #{tpu_custom_call.1} parent=1 // pred_check_branch
      %39 = sbr.rel (0) target = $region21
    $region20: #{tpu_custom_call.1} parent=1 // pred_region
      %41 = dma.done [#allocation5], 32
    $region21: #{tpu_custom_call.1} parent=1 // pred_fallthru
      _
    %v42 = vld [vmem:[#allocation2] sm:$0xff]
    %v43 = vld [vmem:[#allocation4] sm:$0x3]
    %v44 = vld [vmem:[%s2] sm:$0x1]
    %v46 = vperm.slane %v44, 0
    %vm48 = vcmask 261120
    %v50 = vsel %vm48, %v42, 0
    %v53 = vsel %vm48, %v43, 0
    %55 = vmatpush.xpose.msra.mxu0 0.0
    %56 = vmatpush.xpose.msra.mxu0 0.0
    %57 = vmatpush.xpose.msra.mxu0 0.0
    %58 = vmatpush.xpose.msra.mxu0 0.0
    %59 = vmatpush.xpose.msra.mxu0 0.0
    %60 = vmatpush.xpose.msra.mxu0 0.0
    %61 = vmatpush.xpose.msra.mxu0 0.0
    %62 = vmatpush.xpose.msra.mxu0 0.0
    %63 = vmatpush.xpose.msra.mxu0 0.0
    %64 = vmatpush.xpose.msra.mxu0 0.0
    %65 = vmatpush.xpose.msra.mxu0 0.0
    %66 = vmatpush.xpose.msra.mxu0 0.0
    %67 = vmatpush.xpose.msra.mxu0 0.0
    %68 = vmatpush.xpose.msra.mxu0 0.0
    %69 = vmatpush.xpose.msra.mxu0 0.0
    %70 = vmatpush.xpose.msra.mxu0 %v53
    %71 = vmatmul.f32.gmra.mxu0 %v50
    %v72 = vpop.f32.mrf.mxu0
    %v73 = vadd.f32 %v46, %v72
    %74 = vdwg.mxu0
    %vm75 = vcmask 15360
    %76 = vst.msk [vmem:[%s3] sm:$0xff] %vm75, %v73
    // Predicated region
    $region22: #{tpu_custom_call.1} parent=1 // pred_check
      _
    $region23: #{tpu_custom_call.1} parent=1 // pred_check_branch
      %78 = sbr.rel (0) target = $region25
    $region24: #{tpu_custom_call.1} parent=1 // pred_region
      _
    $region25: #{tpu_custom_call.1} parent=1 // pred_fallthru
      _
    // Predicated region
    $region26: #{tpu_custom_call.1} parent=1 // pred_check
      _
    $region27: #{tpu_custom_call.1} parent=1 // pred_check_branch
      %80 = sbr.rel (0) target = $region29
    $region28: #{tpu_custom_call.1} parent=1 // pred_region
      _
    $region29: #{tpu_custom_call.1} parent=1 // pred_fallthru
      _
    %81 = vsyncpa [#allocation3], 1
    %82 = vsyncpa [#allocation5], 1

</llo_original>
